<compile_context>
chip_gen: v7x
topology: tpu7x:2x2x1
jax: 0.10.0
libtpu: 0.0.40
codegen_flags: <defaults>
</compile_context>

<pallas_src>
import functools

import jax
import jax.numpy as jnp
from jax import lax
from jax.experimental import pallas as pl
from jax.experimental.pallas import tpu as pltpu


def _round_up(a: int, b: int) -> int:
    return ((a + b - 1) // b) * b


def _tile_rows(rows: int, width_lanes: int, itemsize: int):
    """Row-tile size + scoped-VMEM limit for a (rows, width_lanes) slab."""
    # Cap the f32 tile at ~2 MiB: HBM roofline saturates around 1-2 MiB tiles;
    # bigger tiles only shrink the grid (worse pipelining / megacore balance)
    # and eat v7x's 64 MiB VMEM.
    tm_cap = max(8, (2 << 20) // (width_lanes * 4))
    # Prefer >= ~8 grid steps when rows allow (pipelining + both v7x TCs).
    tm_steps = max(8, _round_up(pl.cdiv(rows, 8), 8))
    tm = max(8, (min(tm_cap, tm_steps) // 8) * 8)
    if tm > rows:
        tm = rows                      # single full-extent block (rows < 8)
    # Scoped VMEM: 2 in + 2 out pipeline buffers plus in-flight f32 temps.
    tile_bytes = tm * width_lanes * max(4, itemsize)
    vmem_limit = min(48 << 20, max(16 << 20, 8 * tile_bytes))
    return tm, int(vmem_limit)


def _layernorm_wide_kernel(x_ref, w_ref, b_ref, o_ref, *, eps, inv_h):
    """Standard path: one logical row per slab row (hidden >= 128 typically)."""
    x = x_ref[...].astype(jnp.float32)                 # f32 compute (v5e: no bf16 VPU)
    u = jnp.sum(x, axis=-1, keepdims=True) * inv_h     # sum * (1/H), no divide
    xc = x - u
    var = jnp.sum(xc * xc, axis=-1, keepdims=True) * inv_h
    inv_std = lax.rsqrt(var + eps)                      # EUP slot
    # Fused affine epilogue: no separate normalized-y temp.
    o_ref[...] = (xc * (w_ref[...] * inv_std) + b_ref[...]).astype(o_ref.dtype)


def _layernorm_packed_kernel(x_ref, w_ref, b_ref, m_ref, mt_ref, o_ref, *, eps, inv_h):
    """Lane-dense path: each 128-lane row packs g = 128//hidden logical rows.

    m_ref  : (128, g) one-hot segment matrix (lane -> group)
    mt_ref : (g, 128) its transpose (group stats -> lanes)
    w_ref/b_ref : (1, 128) weight/bias tiled g times along lanes.
    """
    x = x_ref[...].astype(jnp.float32)
    m = m_ref[...]
    mt = mt_ref[...]
    # Segmented per-group reductions / broadcasts on the otherwise idle MXU.
    u = jnp.dot(x, m, preferred_element_type=jnp.float32) * inv_h        # (tm, g)
    u_b = jnp.dot(u, mt, preferred_element_type=jnp.float32)             # (tm, 128)
    xc = x - u_b
    var = jnp.dot(xc * xc, m, preferred_element_type=jnp.float32) * inv_h  # (tm, g)
    inv_std = lax.rsqrt(var + eps)
    s_b = jnp.dot(inv_std, mt, preferred_element_type=jnp.float32)       # (tm, 128)
    o_ref[...] = (xc * (w_ref[...] * s_b) + b_ref[...]).astype(o_ref.dtype)


def _layer_norm_wide(x2, w_f32, b_f32, eps):
    rows, hidden = x2.shape
    w_pad = _round_up(hidden, 128)     # sub-128 widths still occupy full lane tiles
    tm, vmem_limit = _tile_rows(rows, w_pad, x2.dtype.itemsize)
    grid = (pl.cdiv(rows, tm),)        # partial tail block: OOB rows discarded

    w2 = w_f32.reshape(1, hidden)
    b2 = b_f32.reshape(1, hidden)
    kernel = functools.partial(_layernorm_wide_kernel,
                               eps=float(eps), inv_h=1.0 / float(hidden))

    return pl.pallas_call(
        kernel,
        out_shape=jax.ShapeDtypeStruct((rows, hidden), x2.dtype),
        grid_spec=pltpu.PrefetchScalarGridSpec(
            num_scalar_prefetch=0,
            grid=grid,
            in_specs=[
                pl.BlockSpec((tm, hidden), lambda i: (i, 0)),
                pl.BlockSpec((1, hidden), lambda i: (0, 0)),
                pl.BlockSpec((1, hidden), lambda i: (0, 0)),
            ],
            out_specs=pl.BlockSpec((tm, hidden), lambda i: (i, 0)),
        ),
        compiler_params=pltpu.CompilerParams(
            dimension_semantics=("parallel",),
            vmem_limit_bytes=vmem_limit,
        ),
    )(x2, w2, b2)


def _layer_norm_packed(x2, w_f32, b_f32, eps):
    rows, hidden = x2.shape
    g = 128 // hidden
    # Pad rows to a multiple of g so the pack is exact; padded rows form
    # complete extra groups (never contaminate real groups) and are sliced off.
    rows_pad = _round_up(rows, g)
    if rows_pad != rows:
        x2 = jnp.pad(x2, ((0, rows_pad - rows), (0, 0)))
    xp = x2.reshape(rows_pad // g, 128)          # lane-dense packed slab
    rp = xp.shape[0]

    tm, vmem_limit = _tile_rows(rp, 128, xp.dtype.itemsize)
    grid = (pl.cdiv(rp, tm),)

    # Resident (1, 128) params and one-hot segment matrices.
    w_t = jnp.tile(w_f32, g).reshape(1, 128)
    b_t = jnp.tile(b_f32, g).reshape(1, 128)
    lane = jnp.arange(128, dtype=jnp.int32)
    m = (lane[:, None] // hidden
         == jnp.arange(g, dtype=jnp.int32)[None, :]).astype(jnp.float32)   # (128, g)
    mt = m.T                                                               # (g, 128)

    kernel = functools.partial(_layernorm_packed_kernel,
                               eps=float(eps), inv_h=1.0 / float(hidden))

    out = pl.pallas_call(
        kernel,
        out_shape=jax.ShapeDtypeStruct((rp, 128), x2.dtype),
        grid_spec=pltpu.PrefetchScalarGridSpec(
            num_scalar_prefetch=0,
            grid=grid,
            in_specs=[
                pl.BlockSpec((tm, 128), lambda i: (i, 0)),
                pl.BlockSpec((1, 128), lambda i: (0, 0)),
                pl.BlockSpec((1, 128), lambda i: (0, 0)),
                pl.BlockSpec((128, g), lambda i: (0, 0)),
                pl.BlockSpec((g, 128), lambda i: (0, 0)),
            ],
            out_specs=pl.BlockSpec((tm, 128), lambda i: (i, 0)),
        ),
        compiler_params=pltpu.CompilerParams(
            dimension_semantics=("parallel",),
            vmem_limit_bytes=vmem_limit,
        ),
    )(xp, w_t, b_t, m, mt)

    out = out.reshape(rows_pad, hidden)
    if rows_pad != rows:
        out = out[:rows]
    return out


def layer_norm(x, weight, bias, *, eps=1e-12):
    """LayerNorm over the last axis of x (any leading shape)."""
    orig_shape = x.shape
    hidden = orig_shape[-1]
    x2 = x.reshape(-1, hidden)
    rows = x2.shape[0]
    if rows == 0:
        return x

    w_f32 = weight.astype(jnp.float32)
    b_f32 = bias.astype(jnp.float32)

    if hidden < 128 and 128 % hidden == 0:
        out2 = _layer_norm_packed(x2, w_f32, b_f32, eps)
    else:
        # hidden < 128 with 128 % hidden != 0 falls back to the (masked-store)
        # wide path; still correct, just not lane-dense.
        out2 = _layer_norm_wide(x2, w_f32, b_f32, eps)
    return out2.reshape(orig_shape)


def _reference_layer_norm(x, weight, bias, eps=1e-12):
    u = jnp.mean(x, axis=-1, keepdims=True)
    s = jnp.mean((x - u) ** 2, axis=-1, keepdims=True)
    y = (x - u) / jnp.sqrt(s + eps)
    return weight * y + bias


if __name__ == "__main__":
    key = jax.random.PRNGKey(0)
    k_x, k_w, k_b, k_x2 = jax.random.split(key, 4)

    # Small-hidden (lane-dense packed) path: hidden=32, consistent with the module.
    batch, seq, hidden = 2, 8, 32
    x = jax.random.normal(k_x, (batch, seq, hidden), dtype=jnp.float32)
    weight = 1.0 + 0.1 * jax.random.normal(k_w, (hidden,), dtype=jnp.float32)
    bias = 0.1 * jax.random.normal(k_b, (hidden,), dtype=jnp.float32)

    out = layer_norm(x, weight, bias, eps=1e-12)
    jax.block_until_ready(out)
    ref = _reference_layer_norm(x, weight, bias, eps=1e-12)
    assert out.shape == x.shape and out.dtype == x.dtype
    assert jnp.allclose(out, ref, atol=1e-5, rtol=1e-5)

    # Wide path (hidden % 128 == 0), multi-step grid with row tiling.
    hidden2 = 256
    x2 = jax.random.normal(k_x2, (4, 128, hidden2), dtype=jnp.float32)
    w2 = 1.0 + 0.05 * jax.random.normal(k_w, (hidden2,), dtype=jnp.float32)
    b2 = 0.1 * jax.random.normal(k_b, (hidden2,), dtype=jnp.float32)
    out2 = layer_norm(x2, w2, b2, eps=1e-12)
    jax.block_until_ready(out2)
    ref2 = _reference_layer_norm(x2, w2, b2, eps=1e-12)
    assert jnp.allclose(out2, ref2, atol=1e-5, rtol=1e-5)

    print("KERNEL_OK")
</pallas_src>

<mosaic_0001>
module attributes {stable_mosaic.version = 11 : i64} {
  func.func @_layernorm_packed_kernel(%arg0: i32, %arg1: memref<4x128xf32, #tpu.memory_space<vmem>>, %arg2: memref<1x128xf32, #tpu.memory_space<vmem>>, %arg3: memref<1x128xf32, #tpu.memory_space<vmem>>, %arg4: memref<128x4xf32, #tpu.memory_space<vmem>>, %arg5: memref<4x128xf32, #tpu.memory_space<vmem>>, %arg6: memref<4x128xf32, #tpu.memory_space<vmem>>) attributes {dimension_semantics = [#tpu.dimension_semantics<parallel>], iteration_bounds = array<i64: 1>, scalar_prefetch = 0 : i64, scratch_operands = 0 : i64, tpu.core_type = #tpu.core_type<tc>, window_params = [{transform_indices = @transform_0, window_bounds = array<i64: 4, 128>}, {pipeline_mode = #tpu.pipeline_mode<synchronous>, transform_indices = @transform_1, window_bounds = array<i64: 1, 128>}, {pipeline_mode = #tpu.pipeline_mode<synchronous>, transform_indices = @transform_2, window_bounds = array<i64: 1, 128>}, {pipeline_mode = #tpu.pipeline_mode<synchronous>, transform_indices = @transform_3, window_bounds = array<i64: 128, 4>}, {pipeline_mode = #tpu.pipeline_mode<synchronous>, transform_indices = @transform_4, window_bounds = array<i64: 4, 128>}, {transform_indices = @transform_5, window_bounds = array<i64: 4, 128>}]} {
    %c0 = arith.constant 0 : index
    %c0_0 = arith.constant 0 : index
    %0 = vector.load %arg1[%c0, %c0_0] : memref<4x128xf32, #tpu.memory_space<vmem>>, vector<4x128xf32>
    %c0_1 = arith.constant 0 : index
    %c0_2 = arith.constant 0 : index
    %1 = vector.load %arg4[%c0_1, %c0_2] : memref<128x4xf32, #tpu.memory_space<vmem>>, vector<128x4xf32>
    %c0_3 = arith.constant 0 : index
    %c0_4 = arith.constant 0 : index
    %2 = vector.load %arg5[%c0_3, %c0_4] : memref<4x128xf32, #tpu.memory_space<vmem>>, vector<4x128xf32>
    %cst = arith.constant dense<0.000000e+00> : vector<4x4xf32>
    %3 = tpu.matmul %0, %1, %cst {dimension_numbers = #tpu.dot_dimension_numbers<[1], [0], [0], [1], [0, 0, 1, 1], [], []>} : vector<4x128xf32>, vector<128x4xf32>, vector<4x4xf32> -> vector<4x4xf32>
    %cst_5 = arith.constant 3.125000e-02 : f32
    %4 = vector.broadcast %cst_5 : f32 to vector<4x4xf32>
    %5 = arith.mulf %3, %4 : vector<4x4xf32>
    %cst_6 = arith.constant dense<0.000000e+00> : vector<4x128xf32>
    %6 = tpu.matmul %5, %2, %cst_6 {dimension_numbers = #tpu.dot_dimension_numbers<[1], [0], [0], [1], [0, 0, 1, 1], [], []>} : vector<4x4xf32>, vector<4x128xf32>, vector<4x128xf32> -> vector<4x128xf32>
    %7 = arith.subf %0, %6 : vector<4x128xf32>
    %8 = arith.mulf %7, %7 : vector<4x128xf32>
    %cst_7 = arith.constant dense<0.000000e+00> : vector<4x4xf32>
    %9 = tpu.matmul %8, %1, %cst_7 {dimension_numbers = #tpu.dot_dimension_numbers<[1], [0], [0], [1], [0, 0, 1, 1], [], []>} : vector<4x128xf32>, vector<128x4xf32>, vector<4x4xf32> -> vector<4x4xf32>
    %cst_8 = arith.constant 3.125000e-02 : f32
    %10 = vector.broadcast %cst_8 : f32 to vector<4x4xf32>
    %11 = arith.mulf %9, %10 : vector<4x4xf32>
    %cst_9 = arith.constant 9.99999996E-13 : f32
    %12 = vector.broadcast %cst_9 : f32 to vector<4x4xf32>
    %13 = arith.addf %11, %12 : vector<4x4xf32>
    %14 = math.rsqrt %13 : vector<4x4xf32>
    %cst_10 = arith.constant dense<0.000000e+00> : vector<4x128xf32>
    %15 = tpu.matmul %14, %2, %cst_10 {dimension_numbers = #tpu.dot_dimension_numbers<[1], [0], [0], [1], [0, 0, 1, 1], [], []>} : vector<4x4xf32>, vector<4x128xf32>, vector<4x128xf32> -> vector<4x128xf32>
    %c0_11 = arith.constant 0 : index
    %c0_12 = arith.constant 0 : index
    %16 = vector.load %arg2[%c0_11, %c0_12] : memref<1x128xf32, #tpu.memory_space<vmem>>, vector<1x128xf32>
    %17 = vector.broadcast %16 : vector<1x128xf32> to vector<4x128xf32>
    %18 = arith.mulf %17, %15 : vector<4x128xf32>
    %19 = arith.mulf %7, %18 : vector<4x128xf32>
    %c0_13 = arith.constant 0 : index
    %c0_14 = arith.constant 0 : index
    %20 = vector.load %arg3[%c0_13, %c0_14] : memref<1x128xf32, #tpu.memory_space<vmem>>, vector<1x128xf32>
    %21 = vector.broadcast %20 : vector<1x128xf32> to vector<4x128xf32>
    %22 = arith.addf %19, %21 : vector<4x128xf32>
    %c0_15 = arith.constant 0 : index
    %c0_16 = arith.constant 0 : index
    %23 = vector.load %arg6[%c0_15, %c0_16] : memref<4x128xf32, #tpu.memory_space<vmem>>, vector<4x128xf32>
    tpu.vector_store %arg6[%c0_15, %c0_16], %22 {strides = array<i32>} : memref<4x128xf32, #tpu.memory_space<vmem>>, vector<4x128xf32>,
    return
  }
  func.func @transform_0(%arg0: i32) -> (i32, i32) {
    %c0_i32 = arith.constant 0 : i32
    %c0_i32_0 = arith.constant 0 : i32
    return %arg0, %c0_i32 : i32, i32
  }
  func.func @transform_1(%arg0: i32) -> (i32, i32) {
    %c0_i32 = arith.constant 0 : i32
    %c0_i32_0 = arith.constant 0 : i32
    %c0_i32_1 = arith.constant 0 : i32
    return %c0_i32, %c0_i32_0 : i32, i32
  }
  func.func @transform_2(%arg0: i32) -> (i32, i32) {
    %c0_i32 = arith.constant 0 : i32
    %c0_i32_0 = arith.constant 0 : i32
    %c0_i32_1 = arith.constant 0 : i32
    return %c0_i32, %c0_i32_0 : i32, i32
  }
  func.func @transform_3(%arg0: i32) -> (i32, i32) {
    %c0_i32 = arith.constant 0 : i32
    %c0_i32_0 = arith.constant 0 : i32
    %c0_i32_1 = arith.constant 0 : i32
    return %c0_i32, %c0_i32_0 : i32, i32
  }
  func.func @transform_4(%arg0: i32) -> (i32, i32) {
    %c0_i32 = arith.constant 0 : i32
    %c0_i32_0 = arith.constant 0 : i32
    %c0_i32_1 = arith.constant 0 : i32
    return %c0_i32, %c0_i32_0 : i32, i32
  }
  func.func @transform_5(%arg0: i32) -> (i32, i32) {
    %c0_i32 = arith.constant 0 : i32
    %c0_i32_0 = arith.constant 0 : i32
    return %arg0, %c0_i32 : i32, i32
  }
}

</mosaic_0001>

<llo_original>
// kernel: tpu_custom_call.1
$region0: #{tpu_custom_call.1}
  #allocation0 [shape = 'u32[]', space=smem, size = 0x4, offset = 0x4, fixed_abs, tag = 'smem constant byte address 0x4 - core index']
  #allocation1 [shape = 'u32[144,128]{1,0:T(1,128)}', space=vmem, size = 0x12000, scoped, tag = 'internal scratch']
  %s0 = inlined_call_operand.vmem [shape: f32[4,128], index: 0, kind: input, shape index: {}]
  %s1 = inlined_call_operand.vmem [shape: f32[1,128], index: 1, kind: input, shape index: {}]
  %s2 = inlined_call_operand.vmem [shape: f32[1,128], index: 2, kind: input, shape index: {}]
  %s3 = inlined_call_operand.vmem [shape: f32[128,4], index: 3, kind: input, shape index: {}]
  %s4 = inlined_call_operand.vmem [shape: f32[4,128], index: 4, kind: input, shape index: {}]
  %s5 = inlined_call_operand.hbm [shape: f32[4,128], index: 5, kind: output, shape index: {}]
  %s6 = sld [smem:[#allocation0]]
  $region30: #{tpu_custom_call.1} parent=0
    _
  %s8 = ssub.s32 1, %s6
  %s9 = scalar_select 0, %s8, %s6
  $region1: #{tpu_custom_call.1} parent=0
    #allocation2 [shape = 'u8[2048]{0}', space=vmem, size = 0x800, scoped, tag = 'output window, operand 0, single buffered']
    #allocation3 [shape = 's32[1]{0}', space=sflag, size = 0x4, scoped, tag = 'scoped memory for tpu_custom_call.1']
    %10 = vsyncpa [#allocation3], 0
    // Predicated region
    $region2: #{tpu_custom_call.1} parent=1 // pred_check
      _
    $region3: #{tpu_custom_call.1} parent=1 // pred_check_branch
      %12 = sbr.rel (0) target = $region5
    $region4: #{tpu_custom_call.1} parent=1 // pred_region
      _
    $region5: #{tpu_custom_call.1} parent=1 // pred_fallthru
      _
    // Predicated region
    $region6: #{tpu_custom_call.1} parent=1 // pred_check
      _
    $region7: #{tpu_custom_call.1} parent=1 // pred_check_branch
      %14 = sbr.rel (0) target = $region9
    $region8: #{tpu_custom_call.1} parent=1 // pred_region
      _
    $region9: #{tpu_custom_call.1} parent=1 // pred_fallthru
      _
    // Predicated region
    $region10: #{tpu_custom_call.1} parent=1 // pred_check
      _
    $region11: #{tpu_custom_call.1} parent=1 // pred_check_branch
      %16 = sbr.rel (0) target = $region13
    $region12: #{tpu_custom_call.1} parent=1 // pred_region
      _
    $region13: #{tpu_custom_call.1} parent=1 // pred_fallthru
      _
    // Predicated region
    $region14: #{tpu_custom_call.1} parent=1 // pred_check
      _
    $region15: #{tpu_custom_call.1} parent=1 // pred_check_branch
      %18 = sbr.rel (0) target = $region17
    $region16: #{tpu_custom_call.1} parent=1 // pred_region
      _
    $region17: #{tpu_custom_call.1} parent=1 // pred_fallthru
      _
    // Predicated region
    $region18: #{tpu_custom_call.1} parent=1 // pred_check
      _
    $region19: #{tpu_custom_call.1} parent=1 // pred_check_branch
      %20 = sbr.rel (0) target = $region21
    $region20: #{tpu_custom_call.1} parent=1 // pred_region
      _
    $region21: #{tpu_custom_call.1} parent=1 // pred_fallthru
      _
    %v21 = vld [vmem:[%s0] sm:$0xf]
    %v22 = vld [vmem:[%s3] sm:$0xff]
    %v23 = vld [vmem:[%s3 + $0x8] sm:$0xff]
    %v24 = vld [vmem:[%s3 + $0x10] sm:$0xff]
    %v25 = vld [vmem:[%s3 + $0x18] sm:$0xff]
    %v26 = vld [vmem:[%s3 + $0x20] sm:$0xff]
    %v27 = vld [vmem:[%s3 + $0x28] sm:$0xff]
    %v28 = vld [vmem:[%s3 + $0x30] sm:$0xff]
    %v29 = vld [vmem:[%s3 + $0x38] sm:$0xff]
    %v30 = vld [vmem:[%s3 + $0x40] sm:$0xff]
    %v31 = vld [vmem:[%s3 + $0x48] sm:$0xff]
    %v32 = vld [vmem:[%s3 + $0x50] sm:$0xff]
    %v33 = vld [vmem:[%s3 + $0x58] sm:$0xff]
    %v34 = vld [vmem:[%s3 + $0x60] sm:$0xff]
    %v35 = vld [vmem:[%s3 + $0x68] sm:$0xff]
    %v36 = vld [vmem:[%s3 + $0x70] sm:$0xff]
    %v37 = vld [vmem:[%s3 + $0x78] sm:$0xff]
    %v38 = vld [vmem:[%s4] sm:$0xf]
    %39 = vmatprep.subr.mxu0 0.0
    %40 = vmatpush1.msra.mxu0 %v22
    %41 = vmatprep.subr.mxu0 0.0
    %42 = vmatpush1.msra.mxu0 %v23
    %43 = vmatprep.subr.mxu0 0.0
    %44 = vmatpush1.msra.mxu0 %v24
    %45 = vmatprep.subr.mxu0 0.0
    %46 = vmatpush1.msra.mxu0 %v25
    %47 = vmatprep.subr.mxu0 0.0
    %48 = vmatpush1.msra.mxu0 %v26
    %49 = vmatprep.subr.mxu0 0.0
    %50 = vmatpush1.msra.mxu0 %v27
    %51 = vmatprep.subr.mxu0 0.0
    %52 = vmatpush1.msra.mxu0 %v28
    %53 = vmatprep.subr.mxu0 0.0
    %54 = vmatpush1.msra.mxu0 %v29
    %55 = vmatprep.subr.mxu0 0.0
    %56 = vmatpush1.msra.mxu0 %v30
    %57 = vmatprep.subr.mxu0 0.0
    %58 = vmatpush1.msra.mxu0 %v31
    %59 = vmatprep.subr.mxu0 0.0
    %60 = vmatpush1.msra.mxu0 %v32
    %61 = vmatprep.subr.mxu0 0.0
    %62 = vmatpush1.msra.mxu0 %v33
    %63 = vmatprep.subr.mxu0 0.0
    %64 = vmatpush1.msra.mxu0 %v34
    %65 = vmatprep.subr.mxu0 0.0
    %66 = vmatpush1.msra.mxu0 %v35
    %67 = vmatprep.subr.mxu0 0.0
    %68 = vmatpush1.msra.mxu0 %v36
    %69 = vmatprep.subr.mxu0 0.0
    %70 = vmatpush1.msra.mxu0 %v37
    %71 = vmatprep.subr.mxu0 0.0
    %72 = vmatpush1.msra.mxu0 0.0
    %73 = vmatprep.subr.mxu0 0.0
    %74 = vmatpush1.msra.mxu0 0.0
    %75 = vmatprep.subr.mxu0 0.0
    %76 = vmatpush1.msra.mxu0 0.0
    %77 = vmatprep.subr.mxu0 0.0
    %78 = vmatpush1.msra.mxu0 0.0
    %79 = vmatprep.subr.mxu0 0.0
    %80 = vmatpush1.msra.mxu0 0.0
    %81 = vmatprep.subr.mxu0 0.0
    %82 = vmatpush1.msra.mxu0 0.0
    %83 = vmatprep.subr.mxu0 0.0
    %84 = vmatpush1.msra.mxu0 0.0
    %85 = vmatprep.subr.mxu0 0.0
    %86 = vmatpush1.msra.mxu0 0.0
    %87 = vmatprep.subr.mxu0 0.0
    %88 = vmatpush1.msra.mxu0 0.0
    %89 = vmatprep.subr.mxu0 0.0
    %90 = vmatpush1.msra.mxu0 0.0
    %91 = vmatprep.subr.mxu0 0.0
    %92 = vmatpush1.msra.mxu0 0.0
    %93 = vmatprep.subr.mxu0 0.0
    %94 = vmatpush1.msra.mxu0 0.0
    %95 = vmatprep.subr.mxu0 0.0
    %96 = vmatpush1.msra.mxu0 0.0
    %97 = vmatprep.subr.mxu0 0.0
    %98 = vmatpush1.msra.mxu0 0.0
    %99 = vmatprep.subr.mxu0 0.0
    %100 = vmatpush1.msra.mxu0 0.0
    %101 = vmatprep.subr.mxu0 0.0
    %102 = vmatpush1.msra.mxu0 0.0
    %103 = vmatprep.mubr.f32.mxu0 0.0
    %104 = vmatmul.mubr.f32.gmra.mrb[0].mxu0 %v21
    %v105 = vpop.f32.mrb[0].mxu0
    %v106 = vadd.f32 0.0, %v105
    %v107 = vpop.f32.mrb[0].mxu0
    %108 = vdwg.mxu0
    %v109 = vmul.f32 %v106, 0.03125
    %vm110 = vcmask 31744
    %v112 = vsel %vm110, %v109, 0
    %vm114 = vcmask 1043456
    %v116 = vsel %vm114, %v38, 0
    %118 = vmatprep.subr.mxu0 0.0
    %119 = vmatpush1.msra.mxu0 %v116
    %120 = vmatprep.subr.mxu0 0.0
    %121 = vmatpush1.msra.mxu0 0.0
    %122 = vmatprep.subr.mxu0 0.0
    %123 = vmatpush1.msra.mxu0 0.0
    %124 = vmatprep.subr.mxu0 0.0
    %125 = vmatpush1.msra.mxu0 0.0
    %126 = vmatprep.subr.mxu0 0.0
    %127 = vmatpush1.msra.mxu0 0.0
    %128 = vmatprep.subr.mxu0 0.0
    %129 = vmatpush1.msra.mxu0 0.0
    %130 = vmatprep.subr.mxu0 0.0
    %131 = vmatpush1.msra.mxu0 0.0
    %132 = vmatprep.subr.mxu0 0.0
    %133 = vmatpush1.msra.mxu0 0.0
    %134 = vmatprep.subr.mxu0 0.0
    %135 = vmatpush1.msra.mxu0 0.0
    %136 = vmatprep.subr.mxu0 0.0
    %137 = vmatpush1.msra.mxu0 0.0
    %138 = vmatprep.subr.mxu0 0.0
    %139 = vmatpush1.msra.mxu0 0.0
    %140 = vmatprep.subr.mxu0 0.0
    %141 = vmatpush1.msra.mxu0 0.0
    %142 = vmatprep.subr.mxu0 0.0
    %143 = vmatpush1.msra.mxu0 0.0
    %144 = vmatprep.subr.mxu0 0.0
    %145 = vmatpush1.msra.mxu0 0.0
    %146 = vmatprep.subr.mxu0 0.0
    %147 = vmatpush1.msra.mxu0 0.0
    %148 = vmatprep.subr.mxu0 0.0
    %149 = vmatpush1.msra.mxu0 0.0
    %150 = vmatprep.subr.mxu0 0.0
    %151 = vmatpush1.msra.mxu0 0.0
    %152 = vmatprep.subr.mxu0 0.0
    %153 = vmatpush1.msra.mxu0 0.0
    %154 = vmatprep.subr.mxu0 0.0
    %155 = vmatpush1.msra.mxu0 0.0
    %156 = vmatprep.subr.mxu0 0.0
    %157 = vmatpush1.msra.mxu0 0.0
    %158 = vmatprep.subr.mxu0 0.0
    %159 = vmatpush1.msra.mxu0 0.0
    %160 = vmatprep.subr.mxu0 0.0
    %161 = vmatpush1.msra.mxu0 0.0
    %162 = vmatprep.subr.mxu0 0.0
    %163 = vmatpush1.msra.mxu0 0.0
    %164 = vmatprep.subr.mxu0 0.0
    %165 = vmatpush1.msra.mxu0 0.0
    %166 = vmatprep.subr.mxu0 0.0
    %167 = vmatpush1.msra.mxu0 0.0
    %168 = vmatprep.subr.mxu0 0.0
    %169 = vmatpush1.msra.mxu0 0.0
    %170 = vmatprep.subr.mxu0 0.0
    %171 = vmatpush1.msra.mxu0 0.0
    %172 = vmatprep.subr.mxu0 0.0
    %173 = vmatpush1.msra.mxu0 0.0
    %174 = vmatprep.subr.mxu0 0.0
    %175 = vmatpush1.msra.mxu0 0.0
    %176 = vmatprep.subr.mxu0 0.0
    %177 = vmatpush1.msra.mxu0 0.0
    %178 = vmatprep.subr.mxu0 0.0
    %179 = vmatpush1.msra.mxu0 0.0
    %180 = vmatprep.subr.mxu0 0.0
    %181 = vmatpush1.msra.mxu0 0.0
    %182 = vmatprep.mubr.f32.mxu0 0.0
    %183 = vmatmul.mubr.f32.gmra.mrb[0].mxu0 %v112
    %v184 = vpop.f32.mrb[0].mxu0
    %v185 = vadd.f32 0.0, %v184
    %v186 = vpop.f32.mrb[0].mxu0
    %187 = vdwg.mxu0
    %v188 = vsub.f32 %v21, %v185
    %v189 = vmul.f32 %v188, %v188
    %190 = vmatprep.subr.mxu0 0.0
    %191 = vmatpush1.msra.mxu0 %v22
    %192 = vmatprep.subr.mxu0 0.0
    %193 = vmatpush1.msra.mxu0 %v23
    %194 = vmatprep.subr.mxu0 0.0
    %195 = vmatpush1.msra.mxu0 %v24
    %196 = vmatprep.subr.mxu0 0.0
    %197 = vmatpush1.msra.mxu0 %v25
    %198 = vmatprep.subr.mxu0 0.0
    %199 = vmatpush1.msra.mxu0 %v26
    %200 = vmatprep.subr.mxu0 0.0
    %201 = vmatpush1.msra.mxu0 %v27
    %202 = vmatprep.subr.mxu0 0.0
    %203 = vmatpush1.msra.mxu0 %v28
    %204 = vmatprep.subr.mxu0 0.0
    %205 = vmatpush1.msra.mxu0 %v29
    %206 = vmatprep.subr.mxu0 0.0
    %207 = vmatpush1.msra.mxu0 %v30
    %208 = vmatprep.subr.mxu0 0.0
    %209 = vmatpush1.msra.mxu0 %v31
    %210 = vmatprep.subr.mxu0 0.0
    %211 = vmatpush1.msra.mxu0 %v32
    %212 = vmatprep.subr.mxu0 0.0
    %213 = vmatpush1.msra.mxu0 %v33
    %214 = vmatprep.subr.mxu0 0.0
    %215 = vmatpush1.msra.mxu0 %v34
    %216 = vmatprep.subr.mxu0 0.0
    %217 = vmatpush1.msra.mxu0 %v35
    %218 = vmatprep.subr.mxu0 0.0
    %219 = vmatpush1.msra.mxu0 %v36
    %220 = vmatprep.subr.mxu0 0.0
    %221 = vmatpush1.msra.mxu0 %v37
    %222 = vmatprep.subr.mxu0 0.0
    %223 = vmatpush1.msra.mxu0 0.0
    %224 = vmatprep.subr.mxu0 0.0
    %225 = vmatpush1.msra.mxu0 0.0
    %226 = vmatprep.subr.mxu0 0.0
    %227 = vmatpush1.msra.mxu0 0.0
    %228 = vmatprep.subr.mxu0 0.0
    %229 = vmatpush1.msra.mxu0 0.0
    %230 = vmatprep.subr.mxu0 0.0
    %231 = vmatpush1.msra.mxu0 0.0
    %232 = vmatprep.subr.mxu0 0.0
    %233 = vmatpush1.msra.mxu0 0.0
    %234 = vmatprep.subr.mxu0 0.0
    %235 = vmatpush1.msra.mxu0 0.0
    %236 = vmatprep.subr.mxu0 0.0
    %237 = vmatpush1.msra.mxu0 0.0
    %238 = vmatprep.subr.mxu0 0.0
    %239 = vmatpush1.msra.mxu0 0.0
    %240 = vmatprep.subr.mxu0 0.0
    %241 = vmatpush1.msra.mxu0 0.0
    %242 = vmatprep.subr.mxu0 0.0
    %243 = vmatpush1.msra.mxu0 0.0
    %244 = vmatprep.subr.mxu0 0.0
    %245 = vmatpush1.msra.mxu0 0.0
    %246 = vmatprep.subr.mxu0 0.0
    %247 = vmatpush1.msra.mxu0 0.0
    %248 = vmatprep.subr.mxu0 0.0
    %249 = vmatpush1.msra.mxu0 0.0
    %250 = vmatprep.subr.mxu0 0.0
    %251 = vmatpush1.msra.mxu0 0.0
    %252 = vmatprep.subr.mxu0 0.0
    %253 = vmatpush1.msra.mxu0 0.0
    %254 = vmatprep.mubr.f32.mxu0 0.0
    %255 = vmatmul.mubr.f32.gmra.mrb[0].mxu0 %v189
    %v256 = vpop.f32.mrb[0].mxu0
    %v257 = vadd.f32 0.0, %v256
    %v258 = vpop.f32.mrb[0].mxu0
    %259 = vdwg.mxu0
    %v260 = vmul.f32 %v257, 0.03125
    %v261 = vadd.f32 %v260, 1e-12
    %v262 = vrsqrt.pop %v261
    %v264 = vsel %vm110, %v262, 0
    %266 = vmatprep.subr.mxu0 0.0
    %267 = vmatpush1.msra.mxu0 %v116
    %268 = vmatprep.subr.mxu0 0.0
    %269 = vmatpush1.msra.mxu0 0.0
    %270 = vmatprep.subr.mxu0 0.0
    %271 = vmatpush1.msra.mxu0 0.0
    %272 = vmatprep.subr.mxu0 0.0
    %273 = vmatpush1.msra.mxu0 0.0
    %274 = vmatprep.subr.mxu0 0.0
    %275 = vmatpush1.msra.mxu0 0.0
    %276 = vmatprep.subr.mxu0 0.0
    %277 = vmatpush1.msra.mxu0 0.0
    %278 = vmatprep.subr.mxu0 0.0
    %279 = vmatpush1.msra.mxu0 0.0
    %280 = vmatprep.subr.mxu0 0.0
    %281 = vmatpush1.msra.mxu0 0.0
    %282 = vmatprep.subr.mxu0 0.0
    %283 = vmatpush1.msra.mxu0 0.0
    %284 = vmatprep.subr.mxu0 0.0
    %285 = vmatpush1.msra.mxu0 0.0
    %286 = vmatprep.subr.mxu0 0.0
    %287 = vmatpush1.msra.mxu0 0.0
    %288 = vmatprep.subr.mxu0 0.0
    %289 = vmatpush1.msra.mxu0 0.0
    %290 = vmatprep.subr.mxu0 0.0
    %291 = vmatpush1.msra.mxu0 0.0
    %292 = vmatprep.subr.mxu0 0.0
    %293 = vmatpush1.msra.mxu0 0.0
    %294 = vmatprep.subr.mxu0 0.0
    %295 = vmatpush1.msra.mxu0 0.0
    %296 = vmatprep.subr.mxu0 0.0
    %297 = vmatpush1.msra.mxu0 0.0
    %298 = vmatprep.subr.mxu0 0.0
    %299 = vmatpush1.msra.mxu0 0.0
    %300 = vmatprep.subr.mxu0 0.0
    %301 = vmatpush1.msra.mxu0 0.0
    %302 = vmatprep.subr.mxu0 0.0
    %303 = vmatpush1.msra.mxu0 0.0
    %304 = vmatprep.subr.mxu0 0.0
    %305 = vmatpush1.msra.mxu0 0.0
    %306 = vmatprep.subr.mxu0 0.0
    %307 = vmatpush1.msra.mxu0 0.0
    %308 = vmatprep.subr.mxu0 0.0
    %309 = vmatpush1.msra.mxu0 0.0
    %310 = vmatprep.subr.mxu0 0.0
    %311 = vmatpush1.msra.mxu0 0.0
    %312 = vmatprep.subr.mxu0 0.0
    %313 = vmatpush1.msra.mxu0 0.0
    %314 = vmatprep.subr.mxu0 0.0
    %315 = vmatpush1.msra.mxu0 0.0
    %316 = vmatprep.subr.mxu0 0.0
    %317 = vmatpush1.msra.mxu0 0.0
    %318 = vmatprep.subr.mxu0 0.0
    %319 = vmatpush1.msra.mxu0 0.0
    %320 = vmatprep.subr.mxu0 0.0
    %321 = vmatpush1.msra.mxu0 0.0
    %322 = vmatprep.subr.mxu0 0.0
    %323 = vmatpush1.msra.mxu0 0.0
    %324 = vmatprep.subr.mxu0 0.0
    %325 = vmatpush1.msra.mxu0 0.0
    %326 = vmatprep.subr.mxu0 0.0
    %327 = vmatpush1.msra.mxu0 0.0
    %328 = vmatprep.subr.mxu0 0.0
    %329 = vmatpush1.msra.mxu0 0.0
    %330 = vmatprep.mubr.f32.mxu0 0.0
    %331 = vmatmul.mubr.f32.gmra.mrb[0].mxu0 %v264
    %v332 = vpop.f32.mrb[0].mxu0
    %v333 = vadd.f32 0.0, %v332
    %v334 = vpop.f32.mrb[0].mxu0
    %335 = vdwg.mxu0
    %v336 = vld [vmem:[%s1] sm:$0x1]
    %v338 = vlaneseq
    %v339 = vshrl.u32 %v338, 7
    %v340 = vsub.s32 0, %v339
    %v341 = vrot.slane %v336, %v340
    %v343 = vmul.f32 %v341, %v333
    %v344 = vmul.f32 %v188, %v343
    %v345 = vld [vmem:[%s2] sm:$0x1]
    %v347 = vlaneseq
    %v348 = vshrl.u32 %v347, 7
    %v349 = vsub.s32 0, %v348
    %v350 = vrot.slane %v345, %v349
    %v352 = vadd.f32 %v344, %v350
    %353 = vst [vmem:[#allocation2] sm:$0xf] %v352
    // Predicated region
    $region22: #{tpu_custom_call.1} parent=1 // pred_check
      _
    $region23: #{tpu_custom_call.1} parent=1 // pred_check_branch
      %355 = sbr.rel (0) target = $region25
    $region24: #{tpu_custom_call.1} parent=1 // pred_region
      %s357 = ssub.s32 64, 64
      %358 = vsyncadd [#allocation3], %s357
      %s360 = sshll.u32 [#allocation2], 4
      %s361 = int_to_ptr.vmem [resolvable:$true] %s360
      %363 = dma.vmem_to_hbm [thread:$0]  %s361, 64, %s5, [#allocation3]
    $region25: #{tpu_custom_call.1} parent=1 // pred_fallthru
      _
    // Predicated region
    $region26: #{tpu_custom_call.1} parent=1 // pred_check
      _
    $region27: #{tpu_custom_call.1} parent=1 // pred_check_branch
      %365 = sbr.rel (0) target = $region29
    $region28: #{tpu_custom_call.1} parent=1 // pred_region
      %366 = dma.done [#allocation3], 64
    $region29: #{tpu_custom_call.1} parent=1 // pred_fallthru
      _
    %367 = vsyncpa [#allocation3], 1

</llo_original>
